<compile_context>
chip_gen: v6e
topology: v6e:2x2x1
jax: 0.10.0
libtpu: 0.0.40
codegen_flags: <defaults>
</compile_context>

<pallas_src>
import math

import jax
import jax.numpy as jnp
from jax.experimental import pallas as pl
from jax.experimental.pallas import tpu as pltpu

_MiB = 1024 * 1024


def _copy_kernel(x_ref, o_ref):
    # Identity copy of the current lane-dense tile (full-width vst).
    o_ref[...] = x_ref[...]


def _resolve_shape(shape, total):
    """torch.view shape semantics: at most one -1 wildcard."""
    if isinstance(shape, int):
        shape = (shape,)
    shape = tuple(int(s) for s in shape)
    if -1 in shape:
        idx = shape.index(-1)
        known = 1
        for i, s in enumerate(shape):
            if i != idx:
                known *= s
        assert known > 0 and total % known == 0, (shape, total)
        shape = shape[:idx] + (total // known,) + shape[idx + 1:]
    prod = math.prod(shape) if shape else 1
    assert prod == total, (shape, total)
    return shape


def _device_params():
    """(per-tile byte budget, vmem_limit_bytes, tensorcores per chip)."""
    budget, vmem_limit, cores = 4 * _MiB, 32 * _MiB, 1   # conservative default
    try:
        kind = jax.devices()[0].device_kind.lower()
    except Exception:
        kind = ""
    if "v5" in kind:
        # 128 MiB physical VMEM; ~0.82 TB/s HBM — purely DMA bound, 3 MiB
        # tiles amortize the ~0.35 us/step overhead without VMEM pressure.
        budget, vmem_limit, cores = 3 * _MiB, 32 * _MiB, 1
    elif "v6" in kind:
        # 128 MiB physical VMEM; 4x tile (double-buffered in+out) = 32 MiB.
        budget, vmem_limit, cores = 8 * _MiB, 64 * _MiB, 1
    elif "v7" in kind or "7x" in kind:
        # 64 MiB physical VMEM per core; 2 TensorCores share the chip.
        budget, vmem_limit, cores = 6 * _MiB, 32 * _MiB, 2
    return budget, vmem_limit, cores


def _materialized_copy(x, out_shape):
    """Explicit HBM copy of `x` reinterpreted as `out_shape` (Pallas path)."""
    total = int(x.size)
    elem_bytes = jnp.dtype(x.dtype).itemsize
    if total == 0 or total % 128 != 0:
        # No lane-dense (unmasked, >=128-wide) tiling exists; a masked
        # narrow-store copy is slower than the metadata reshape and a huge
        # non-aligned trailing dim could blow the VMEM budget.  Fall back.
        return jnp.reshape(x, out_shape)

    budget, vmem_limit, cores = _device_params()

    # Native packed tile height: 8 for f32, 16 for bf16, 32 for int8/fp8.
    sub = max(8, 32 // elem_bytes)

    # Lane width: prefer the natural trailing dim when it is already
    # 128-aligned (the flattening then only collapses leading dims); else the
    # widest of {1024, 512, 256, 128} dividing the element count.
    L = None
    if (x.ndim >= 2 and x.shape[-1] % 128 == 0
            and sub * int(x.shape[-1]) * elem_bytes <= budget):
        L = int(x.shape[-1])
    else:
        for cand in (1024, 512, 256, 128):
            if total % cand == 0:
                L = cand
                break
    rows = total // L

    # Sublane-aligned row tile sized against the per-generation VMEM budget
    # (double-buffered input + output = 4x tile live).
    rows_budget = max(sub, (budget // (L * elem_bytes)) // sub * sub)
    tile_rows = rows if rows <= rows_budget else rows_budget

    # Dual-TensorCore chips (v7x): make sure the "parallel" grid axis has at
    # least 2 steps for non-trivial copies so both cores' DMA paths are used.
    total_bytes = total * elem_bytes
    if cores >= 2 and total_bytes > _MiB and rows >= 2 * sub:
        half = max(sub, (rows // 2) // sub * sub)
        tile_rows = min(tile_rows, half)

    grid = (pl.cdiv(rows, tile_rows),)
    flat = jnp.reshape(x, (rows, L))

    flat_out = pl.pallas_call(
        _copy_kernel,
        out_shape=jax.ShapeDtypeStruct((rows, L), flat.dtype),
        grid_spec=pltpu.PrefetchScalarGridSpec(
            num_scalar_prefetch=0,
            grid=grid,
            in_specs=[pl.BlockSpec((tile_rows, L), lambda i: (i, 0))],
            out_specs=pl.BlockSpec((tile_rows, L), lambda i: (i, 0)),
        ),
        compiler_params=pltpu.CompilerParams(
            dimension_semantics=("parallel",),
            vmem_limit_bytes=vmem_limit,
        ),
        cost_estimate=pl.CostEstimate(
            flops=0, transcendentals=0, bytes_accessed=2 * total_bytes),
    )(flat)

    # Final shape change is metadata only.
    return jnp.reshape(flat_out, out_shape)


def view_pallas(x, shape, materialize=False):
    """Equivalent of torch `x.view(shape)`.

    Default path is metadata-only (no data movement), matching torch `.view`
    semantics exactly.  Pass `materialize=True` to force an explicit copy
    through the Pallas lane-dense copy kernel.
    """
    if isinstance(x, tuple):
        x = x[0]
    out_shape = _resolve_shape(shape, int(x.size))
    if not materialize:
        return jnp.reshape(x, out_shape)
    return _materialized_copy(x, out_shape)


if __name__ == "__main__":
    key = jax.random.PRNGKey(0)
    # Small NCHW input consistent with the module's usage.
    x = jax.random.normal(key, (2, 4, 16, 16), dtype=jnp.float32)
    ref = jnp.reshape(x, (2, 1024))

    # Module forward semantics: metadata-only view (shape = (2, -1)).
    out = jax.block_until_ready(view_pallas(x, (2, -1)))
    assert out.shape == ref.shape == (2, 1024), out.shape
    assert out.dtype == ref.dtype
    assert bool(jnp.array_equal(out, ref))

    # Explicitly materialized copy exercises the Pallas kernel.
    out_m = jax.block_until_ready(view_pallas(x, (2, -1), materialize=True))
    assert out_m.shape == (2, 1024) and out_m.dtype == ref.dtype
    assert bool(jnp.array_equal(out_m, ref))

    # A second target shape (no -1) through the kernel path as well.
    out2 = jax.block_until_ready(view_pallas(x, (8, 256), materialize=True))
    assert out2.shape == (8, 256)
    assert bool(jnp.array_equal(out2, jnp.reshape(x, (8, 256))))

    print("KERNEL_OK")
</pallas_src>

<mosaic_0001>
module attributes {stable_mosaic.version = 11 : i64} {
  func.func @_copy_kernel(%arg0: i32, %arg1: memref<2x1024xf32, #tpu.memory_space<vmem>>, %arg2: memref<2x1024xf32, #tpu.memory_space<vmem>>) attributes {dimension_semantics = [#tpu.dimension_semantics<parallel>], iteration_bounds = array<i64: 1>, scalar_prefetch = 0 : i64, scratch_operands = 0 : i64, tpu.core_type = #tpu.core_type<tc>, window_params = [{transform_indices = @transform_0, window_bounds = array<i64: 2, 1024>}, {transform_indices = @transform_1, window_bounds = array<i64: 2, 1024>}]} {
    %c0 = arith.constant 0 : index
    %c0_0 = arith.constant 0 : index
    %0 = vector.load %arg1[%c0, %c0_0] : memref<2x1024xf32, #tpu.memory_space<vmem>>, vector<2x1024xf32>
    %c0_1 = arith.constant 0 : index
    %c0_2 = arith.constant 0 : index
    %1 = vector.load %arg2[%c0_1, %c0_2] : memref<2x1024xf32, #tpu.memory_space<vmem>>, vector<2x1024xf32>
    tpu.vector_store %arg2[%c0_1, %c0_2], %0 {strides = array<i32>} : memref<2x1024xf32, #tpu.memory_space<vmem>>, vector<2x1024xf32>,
    return
  }
  func.func @transform_0(%arg0: i32) -> (i32, i32) {
    %c0_i32 = arith.constant 0 : i32
    %c0_i32_0 = arith.constant 0 : i32
    return %arg0, %c0_i32 : i32, i32
  }
  func.func @transform_1(%arg0: i32) -> (i32, i32) {
    %c0_i32 = arith.constant 0 : i32
    %c0_i32_0 = arith.constant 0 : i32
    return %arg0, %c0_i32 : i32, i32
  }
}

</mosaic_0001>

<llo_original>
// kernel: tpu_custom_call.1
$region0: #{tpu_custom_call.1}
  #allocation0 [shape = 'u32[]', space=smem, size = 0x4, offset = 0x4, fixed_abs, tag = 'smem constant byte address 0x4 - core index']
  #allocation1 [shape = 'u32[144,128]{1,0:T(1,128)}', space=vmem, size = 0x12000, scoped, tag = 'internal scratch']
  %s0 = inlined_call_operand.hbm [shape: f32[2,1024], index: 0, kind: input, shape index: {}]
  %s1 = inlined_call_operand.hbm [shape: f32[2,1024], index: 1, kind: output, shape index: {}]
  %s2 = sld [smem:[#allocation0]]
  $region18: #{tpu_custom_call.1} parent=0
    _
  %s4 = ssub.s32 1, %s2
  %s5 = scalar_select 0, %s4, %s2
  $region1: #{tpu_custom_call.1} parent=0
    #allocation2 [shape = 'u8[8192]{0}', space=vmem, size = 0x2000, scoped, tag = 'input window, operand 0, single buffered']
    #allocation3 [shape = 's32[1]{0}', space=sflag, size = 0x4, scoped, tag = 'scoped memory for tpu_custom_call.1']
    #allocation4 [shape = 's32[1]{0}', space=sflag, size = 0x4, scoped, tag = 'scoped memory for tpu_custom_call.1']
    #allocation5 [shape = 'u8[8192]{0}', space=vmem, size = 0x2000, scoped, tag = 'output window, operand 0, single buffered']
    %6 = vsyncpa [#allocation3], 0
    %7 = vsyncpa [#allocation4], 0
    // Predicated region
    $region2: #{tpu_custom_call.1} parent=1 // pred_check
      _
    $region3: #{tpu_custom_call.1} parent=1 // pred_check_branch
      %9 = sbr.rel (0) target = $region5
    $region4: #{tpu_custom_call.1} parent=1 // pred_region
      %s11 = ssub.s32 256, 256
      %12 = vsyncadd [#allocation3], %s11
      %s14 = sshll.u32 [#allocation2], 4
      %s15 = int_to_ptr.vmem [resolvable:$true] %s14
      %17 = dma.hbm_to_vmem [thread:$0]  %s0, 256, %s15, [#allocation3]
    $region5: #{tpu_custom_call.1} parent=1 // pred_fallthru
      _
    // Predicated region
    $region6: #{tpu_custom_call.1} parent=1 // pred_check
      _
    $region7: #{tpu_custom_call.1} parent=1 // pred_check_branch
      %19 = sbr.rel (0) target = $region9
    $region8: #{tpu_custom_call.1} parent=1 // pred_region
      %20 = dma.done [#allocation3], 256
    $region9: #{tpu_custom_call.1} parent=1 // pred_fallthru
      _
    %v21 = vld [vmem:[#allocation2] sm:$0xff]
    %v22 = vld [vmem:[#allocation2 + $0x8] sm:$0xff]
    %23 = vst [vmem:[#allocation5] sm:$0xff] %v21
    %24 = vst [vmem:[#allocation5 + $0x8] sm:$0xff] %v22
    // Predicated region
    $region10: #{tpu_custom_call.1} parent=1 // pred_check
      _
    $region11: #{tpu_custom_call.1} parent=1 // pred_check_branch
      %26 = sbr.rel (0) target = $region13
    $region12: #{tpu_custom_call.1} parent=1 // pred_region
      %s28 = ssub.s32 256, 256
      %29 = vsyncadd [#allocation4], %s28
      %s31 = sshll.u32 [#allocation5], 4
      %s32 = int_to_ptr.vmem [resolvable:$true] %s31
      %34 = dma.vmem_to_hbm [thread:$0]  %s32, 256, %s1, [#allocation4]
    $region13: #{tpu_custom_call.1} parent=1 // pred_fallthru
      _
    // Predicated region
    $region14: #{tpu_custom_call.1} parent=1 // pred_check
      _
    $region15: #{tpu_custom_call.1} parent=1 // pred_check_branch
      %36 = sbr.rel (0) target = $region17
    $region16: #{tpu_custom_call.1} parent=1 // pred_region
      %37 = dma.done [#allocation4], 256
    $region17: #{tpu_custom_call.1} parent=1 // pred_fallthru
      _
    %38 = vsyncpa [#allocation3], 1
    %39 = vsyncpa [#allocation4], 1

</llo_original>
